<compile_context>
chip_gen: v6e
topology: v6e:2x2x1
jax: 0.10.0
libtpu: 0.0.40
codegen_flags: <defaults>
</compile_context>

<pallas_src>
import functools

import jax
import jax.numpy as jnp
from jax.experimental import pallas as pl
from jax.experimental.pallas import tpu as pltpu


def _round_up(x: int, n: int) -> int:
    return (x + n - 1) // n * n


def _circle_core_kernel(cos_ref, lab_ref, loss_ref, corr_ref,
                        m_scr, l_scr, tcos_scr, *,
                        m, s, num_classes, block_cols, mask_cols):
    j = pl.program_id(1)

    # ---- init per-row online-LSE carry at the first class tile of each row tile ----
    @pl.when(j == 0)
    def _init():
        m_scr[...] = jnp.full_like(m_scr, -jnp.inf)
        l_scr[...] = jnp.zeros_like(l_scr)
        tcos_scr[...] = jnp.zeros_like(tcos_scr)

    cosine = cos_ref[...].astype(jnp.float32)        # [TB, TC] (bf16 inputs upcast here)
    label = lab_ref[...]                             # [TB, 1] int32
    tb, tc = cosine.shape

    col = j * block_cols + jax.lax.broadcasted_iota(jnp.int32, (tb, tc), 1)
    is_target = col == label                         # [TB, TC]

    # Negative branch over the full tile -- the only full-tile VALU chain in the kernel.
    sn = jnp.maximum(cosine + m, 0.0) * (cosine - m) * s              # [TB, TC]

    # Per-row target cosine: exactly one column matches across all class tiles, so the masked
    # sum is the target cosine when it lives in this tile and 0 otherwise.
    cos_t = jnp.sum(jnp.where(is_target, cosine, 0.0), axis=1, keepdims=True)   # [TB, 1]
    tcos_scr[...] += cos_t
    # Positive branch evaluated per row (not per element); only selected where is_target.
    sp_row = jnp.maximum(1.0 + m - cos_t, 0.0) * (cos_t - (1.0 - m)) * s         # [TB, 1]

    logits = jnp.where(is_target, sp_row, sn)
    if mask_cols:  # static: only emitted when C was padded up to a lane multiple
        logits = jnp.where(col < num_classes, logits, -jnp.inf)

    # ---- online log-sum-exp carry across class tiles ----
    m_old = m_scr[...]
    m_new = jnp.maximum(m_old, jnp.max(logits, axis=1, keepdims=True))
    l_scr[...] = jnp.exp(m_old - m_new) * l_scr[...] + jnp.sum(
        jnp.exp(logits - m_new), axis=1, keepdims=True)
    m_scr[...] = m_new

    # ---- finalize per-row loss / top-1 correctness on the last class tile ----
    @pl.when(j == pl.num_programs(1) - 1)
    def _finalize():
        t = tcos_scr[...]
        # Same expression (same float ops on the same value) as sp_row above, so the target
        # column's logit and this recomputation are bitwise identical.
        target_logit = jnp.maximum(1.0 + m - t, 0.0) * (t - (1.0 - m)) * s
        m_fin = m_scr[...]
        loss_ref[...] = m_fin + jnp.log(l_scr[...]) - target_logit
        corr_ref[...] = (target_logit >= m_fin).astype(jnp.float32)


def circle_core(cosine, label, m: float = 0.35, s: float = 256.0,
                block_rows: int | None = None, block_cols: int | None = None):
    """Returns (loss, prec1) matching CircleCore.forward semantics (forward only)."""
    B, C = cosine.shape
    itemsize = jnp.dtype(cosine.dtype).itemsize
    label2d = label.astype(jnp.int32).reshape(B, 1)

    # --- class (lane) tiling: lane-dense blocks, multiple of 128 ---
    if block_cols is None:
        tc = min(_round_up(C, 128), 8192)
    else:
        tc = _round_up(max(int(block_cols), 1), 128)
    num_col_tiles = pl.cdiv(C, tc)
    c_pad = num_col_tiles * tc

    # --- row (sublane) tiling: largest tile whose working set fits comfortably in VMEM.
    # Per step ~ 2*tb*tc*itemsize (double-buffered input) + ~5*tb*tc*4 (f32 temporaries).
    if block_rows is None:
        budget = 28 * 1024 * 1024
        per_row = tc * (2 * itemsize + 5 * 4)
        tb = max(8, min(2048, (budget // per_row) // 8 * 8))
    else:
        tb = _round_up(max(int(block_rows), 1), 8)
    tb = min(tb, _round_up(B, 8))
    num_row_tiles = pl.cdiv(B, tb)
    b_pad = num_row_tiles * tb

    if b_pad != B or c_pad != C:
        cosine = jnp.pad(cosine, ((0, b_pad - B), (0, c_pad - C)))
    if b_pad != B:
        label2d = jnp.pad(label2d, ((0, b_pad - B), (0, 0)))

    kernel = functools.partial(
        _circle_core_kernel, m=float(m), s=float(s), num_classes=C,
        block_cols=tc, mask_cols=(c_pad != C))

    cost = pl.CostEstimate(
        flops=12 * b_pad * c_pad,
        transcendentals=b_pad * c_pad + b_pad,
        bytes_accessed=b_pad * c_pad * itemsize + b_pad * (4 + 8),
    )

    loss_rows, corr_rows = pl.pallas_call(
        kernel,
        out_shape=(
            jax.ShapeDtypeStruct((b_pad, 1), jnp.float32),
            jax.ShapeDtypeStruct((b_pad, 1), jnp.float32),
        ),
        grid_spec=pltpu.PrefetchScalarGridSpec(
            num_scalar_prefetch=0,
            grid=(num_row_tiles, num_col_tiles),
            in_specs=[
                pl.BlockSpec((tb, tc), lambda i, j: (i, j)),
                pl.BlockSpec((tb, 1), lambda i, j: (i, 0)),
            ],
            out_specs=[
                pl.BlockSpec((tb, 1), lambda i, j: (i, 0)),
                pl.BlockSpec((tb, 1), lambda i, j: (i, 0)),
            ],
            scratch_shapes=[
                pltpu.VMEM((tb, 1), jnp.float32),   # running row max
                pltpu.VMEM((tb, 1), jnp.float32),   # running sum of exp
                pltpu.VMEM((tb, 1), jnp.float32),   # running target cosine
            ],
        ),
        compiler_params=pltpu.CompilerParams(
            # Row tiles are independent (per-tile outputs + per-core scratch) -> "parallel"
            # so v7x can shard them across both TensorCores; the class axis carries the
            # online-LSE reduction -> "arbitrary".
            dimension_semantics=("parallel", "arbitrary"),
            vmem_limit_bytes=48 * 1024 * 1024,
        ),
        cost_estimate=cost,
    )(cosine, label2d)

    # Final tiny reduction in the wrapper (drop padded rows).
    loss = jnp.sum(loss_rows[:B, 0]) / B
    prec1 = jnp.sum(corr_rows[:B, 0]) * (100.0 / B)
    return loss, prec1


def _reference(cosine, label, m=0.35, s=256.0):
    """Pure-JAX reference for sanity check."""
    cosine = cosine.astype(jnp.float32)
    B, C = cosine.shape
    alpha_p = jax.nn.relu(1.0 + m - cosine)
    alpha_n = jax.nn.relu(cosine + m)
    sp_y = alpha_p * (cosine - (1.0 - m))
    sp_j = alpha_n * (cosine - m)
    one_hot = jax.nn.one_hot(label, C, dtype=jnp.float32)
    output = (one_hot * sp_y + (1.0 - one_hot) * sp_j) * s
    log_probs = jax.nn.log_softmax(output, axis=1)
    loss = -jnp.mean(jnp.sum(one_hot * log_probs, axis=1))
    prec1 = jnp.mean((jnp.argmax(output, axis=1) == label).astype(jnp.float32)) * 100.0
    return loss, prec1


if __name__ == "__main__":
    key = jax.random.PRNGKey(0)
    k1, k2, k3, k4, k5, k6 = jax.random.split(key, 6)

    # Case 1: tiny single-tile problem (C=16 padded to one 128-lane tile internally).
    B1, C1 = 8, 16
    cos1 = jax.random.uniform(k1, (B1, C1), jnp.float32, minval=-1.0, maxval=1.0)
    lab1 = jax.random.randint(k2, (B1,), 0, C1, dtype=jnp.int32)
    loss1, prec1 = circle_core(cos1, lab1, m=0.35, s=256.0)
    jax.block_until_ready((loss1, prec1))
    ref_loss1, ref_prec1 = _reference(cos1, lab1)
    assert jnp.allclose(loss1, ref_loss1, rtol=1e-4, atol=1e-4), (loss1, ref_loss1)
    assert jnp.allclose(prec1, ref_prec1, rtol=1e-5, atol=1e-5), (prec1, ref_prec1)

    # Case 2: ragged batch + multiple row tiles + multiple class tiles (online-LSE path).
    B2, C2 = 20, 300
    cos2 = jax.random.uniform(k3, (B2, C2), jnp.float32, minval=-1.0, maxval=1.0)
    lab2 = jax.random.randint(k4, (B2,), 0, C2, dtype=jnp.int32)
    loss2, prec2 = circle_core(cos2, lab2, m=0.35, s=256.0, block_rows=8, block_cols=128)
    jax.block_until_ready((loss2, prec2))
    ref_loss2, ref_prec2 = _reference(cos2, lab2)
    assert jnp.allclose(loss2, ref_loss2, rtol=1e-4, atol=1e-4), (loss2, ref_loss2)
    assert jnp.allclose(prec2, ref_prec2, rtol=1e-5, atol=1e-5), (prec2, ref_prec2)

    # Case 3: bf16 cosine input (half the HBM traffic; kernel upcasts on load).
    B3, C3 = 16, 256
    cos3 = jax.random.uniform(k5, (B3, C3), jnp.float32, minval=-1.0, maxval=1.0).astype(jnp.bfloat16)
    lab3 = jax.random.randint(k6, (B3,), 0, C3, dtype=jnp.int32)
    loss3, prec3 = circle_core(cos3, lab3, m=0.35, s=256.0)
    jax.block_until_ready((loss3, prec3))
    ref_loss3, ref_prec3 = _reference(cos3, lab3)
    assert jnp.allclose(loss3, ref_loss3, rtol=1e-3, atol=1e-3), (loss3, ref_loss3)
    assert jnp.allclose(prec3, ref_prec3, rtol=1e-5, atol=1e-5), (prec3, ref_prec3)

    print("KERNEL_OK")
</pallas_src>

<mosaic_0001>
module attributes {stable_mosaic.version = 11 : i64} {
  func.func @_circle_core_kernel(%arg0: i32, %arg1: i32, %arg2: memref<8x128xf32, #tpu.memory_space<vmem>>, %arg3: memref<8x1xi32, #tpu.memory_space<vmem>>, %arg4: memref<8x1xf32, #tpu.memory_space<vmem>>, %arg5: memref<8x1xf32, #tpu.memory_space<vmem>>, %arg6: memref<8x1xf32, #tpu.memory_space<vmem>>, %arg7: memref<8x1xf32, #tpu.memory_space<vmem>>, %arg8: memref<8x1xf32, #tpu.memory_space<vmem>>) attributes {dimension_semantics = [#tpu.dimension_semantics<parallel>, #tpu.dimension_semantics<arbitrary>], iteration_bounds = array<i64: 1, 1>, scalar_prefetch = 0 : i64, scratch_operands = 3 : i64, tpu.core_type = #tpu.core_type<tc>, window_params = [{transform_indices = @transform_0, window_bounds = array<i64: 8, 128>}, {transform_indices = @transform_1, window_bounds = array<i64: 8, 1>}, {transform_indices = @transform_2, window_bounds = array<i64: 8, 1>}, {transform_indices = @transform_3, window_bounds = array<i64: 8, 1>}]} {
    %c0_i32 = arith.constant 0 : i32
    %0 = arith.cmpi eq, %arg1, %c0_i32 : i32
    %1 = arith.extui %0 : i1 to i32
    %c0_i32_0 = arith.constant 0 : i32
    %2 = arith.cmpi ne, %1, %c0_i32_0 : i32
    scf.if %2 {
      %cst_30 = arith.constant 0xFF800000 : f32
      %62 = vector.broadcast %cst_30 : f32 to vector<8x1xf32>
      %c0_31 = arith.constant 0 : index
      %c0_32 = arith.constant 0 : index
      %63 = vector.load %arg6[%c0_31, %c0_32] : memref<8x1xf32, #tpu.memory_space<vmem>>, vector<8x1xf32>
      tpu.vector_store %arg6[%c0_31, %c0_32], %62 {strides = array<i32>} : memref<8x1xf32, #tpu.memory_space<vmem>>, vector<8x1xf32>,
      %cst_33 = arith.constant 0.000000e+00 : f32
      %64 = vector.broadcast %cst_33 : f32 to vector<8x1xf32>
      %c0_34 = arith.constant 0 : index
      %c0_35 = arith.constant 0 : index
      %65 = vector.load %arg7[%c0_34, %c0_35] : memref<8x1xf32, #tpu.memory_space<vmem>>, vector<8x1xf32>
      tpu.vector_store %arg7[%c0_34, %c0_35], %64 {strides = array<i32>} : memref<8x1xf32, #tpu.memory_space<vmem>>, vector<8x1xf32>,
      %cst_36 = arith.constant 0.000000e+00 : f32
      %66 = vector.broadcast %cst_36 : f32 to vector<8x1xf32>
      %c0_37 = arith.constant 0 : index
      %c0_38 = arith.constant 0 : index
      %67 = vector.load %arg8[%c0_37, %c0_38] : memref<8x1xf32, #tpu.memory_space<vmem>>, vector<8x1xf32>
      tpu.vector_store %arg8[%c0_37, %c0_38], %66 {strides = array<i32>} : memref<8x1xf32, #tpu.memory_space<vmem>>, vector<8x1xf32>,
    } else {
    }
    %c0 = arith.constant 0 : index
    %c0_1 = arith.constant 0 : index
    %3 = vector.load %arg2[%c0, %c0_1] : memref<8x128xf32, #tpu.memory_space<vmem>>, vector<8x128xf32>
    %c0_2 = arith.constant 0 : index
    %c0_3 = arith.constant 0 : index
    %4 = vector.load %arg3[%c0_2, %c0_3] : memref<8x1xi32, #tpu.memory_space<vmem>>, vector<8x1xi32>
    %c128_i32 = arith.constant 128 : i32
    %5 = arith.muli %arg1, %c128_i32 : i32
    %6 = tpu.iota {dimensions = array<i32: 1>} : vector<8x128xi32>
    %7 = vector.broadcast %5 : i32 to vector<8x128xi32>
    %8 = arith.addi %7, %6 : vector<8x128xi32>
    %9 = vector.broadcast %4 : vector<8x1xi32> to vector<8x128xi32>
    %10 = arith.cmpi eq, %8, %9 : vector<8x128xi32>
    %cst = arith.constant 3.500000e-01 : f32
    %11 = vector.broadcast %cst : f32 to vector<8x128xf32>
    %12 = arith.addf %3, %11 : vector<8x128xf32>
    %cst_4 = arith.constant 0.000000e+00 : f32
    %13 = vector.broadcast %cst_4 : f32 to vector<8x128xf32>
    %14 = arith.maximumf %12, %13 : vector<8x128xf32>
    %cst_5 = arith.constant 3.500000e-01 : f32
    %15 = vector.broadcast %cst_5 : f32 to vector<8x128xf32>
    %16 = arith.subf %3, %15 : vector<8x128xf32>
    %17 = arith.mulf %14, %16 : vector<8x128xf32>
    %cst_6 = arith.constant 2.560000e+02 : f32
    %18 = vector.broadcast %cst_6 : f32 to vector<8x128xf32>
    %19 = arith.mulf %17, %18 : vector<8x128xf32>
    %cst_7 = arith.constant 0.000000e+00 : f32
    %20 = vector.broadcast %cst_7 : f32 to vector<8x128xf32>
    %21 = arith.select %10, %3, %20 : vector<8x128xi1>, vector<8x128xf32>
    %cst_8 = arith.constant dense<0.000000e+00> : vector<8xf32>
    %22 = vector.multi_reduction <add>, %21, %cst_8 [1] : vector<8x128xf32> to vector<8xf32>
    %23 = vector.shape_cast %22 : vector<8xf32> to vector<8x1xf32>
    %c0_9 = arith.constant 0 : index
    %c0_10 = arith.constant 0 : index
    %24 = vector.load %arg8[%c0_9, %c0_10] : memref<8x1xf32, #tpu.memory_space<vmem>>, vector<8x1xf32>
    %25 = arith.addf %24, %23 : vector<8x1xf32>
    %c0_11 = arith.constant 0 : index
    %c0_12 = arith.constant 0 : index
    %26 = vector.load %arg8[%c0_11, %c0_12] : memref<8x1xf32, #tpu.memory_space<vmem>>, vector<8x1xf32>
    tpu.vector_store %arg8[%c0_11, %c0_12], %25 {strides = array<i32>} : memref<8x1xf32, #tpu.memory_space<vmem>>, vector<8x1xf32>,
    %cst_13 = arith.constant 1.350000e+00 : f32
    %27 = vector.broadcast %cst_13 : f32 to vector<8x1xf32>
    %28 = arith.subf %27, %23 : vector<8x1xf32>
    %cst_14 = arith.constant 0.000000e+00 : f32
    %29 = vector.broadcast %cst_14 : f32 to vector<8x1xf32>
    %30 = arith.maximumf %28, %29 : vector<8x1xf32>
    %cst_15 = arith.constant 6.500000e-01 : f32
    %31 = vector.broadcast %cst_15 : f32 to vector<8x1xf32>
    %32 = arith.subf %23, %31 : vector<8x1xf32>
    %33 = arith.mulf %30, %32 : vector<8x1xf32>
    %cst_16 = arith.constant 2.560000e+02 : f32
    %34 = vector.broadcast %cst_16 : f32 to vector<8x1xf32>
    %35 = arith.mulf %33, %34 : vector<8x1xf32>
    %36 = vector.shape_cast %35 : vector<8x1xf32> to vector<8x1xf32>
    %37 = vector.broadcast %36 : vector<8x1xf32> to vector<8x128xf32>
    %38 = arith.select %10, %37, %19 : vector<8x128xi1>, vector<8x128xf32>
    %c16_i32 = arith.constant 16 : i32
    %39 = vector.broadcast %c16_i32 : i32 to vector<8x128xi32>
    %40 = arith.cmpi slt, %8, %39 : vector<8x128xi32>
    %cst_17 = arith.constant 0xFF800000 : f32
    %41 = vector.broadcast %cst_17 : f32 to vector<8x128xf32>
    %42 = arith.select %40, %38, %41 : vector<8x128xi1>, vector<8x128xf32>
    %c0_18 = arith.constant 0 : index
    %c0_19 = arith.constant 0 : index
    %43 = vector.load %arg6[%c0_18, %c0_19] : memref<8x1xf32, #tpu.memory_space<vmem>>, vector<8x1xf32>
    %cst_20 = arith.constant dense<0xFF800000> : vector<8xf32>
    %44 = vector.multi_reduction <maximumf>, %42, %cst_20 [1] : vector<8x128xf32> to vector<8xf32>
    %45 = vector.shape_cast %44 : vector<8xf32> to vector<8x1xf32>
    %46 = arith.maximumf %43, %45 : vector<8x1xf32>
    %47 = arith.subf %43, %46 : vector<8x1xf32>
    %48 = math.exp %47 : vector<8x1xf32>
    %c0_21 = arith.constant 0 : index
    %c0_22 = arith.constant 0 : index
    %49 = vector.load %arg7[%c0_21, %c0_22] : memref<8x1xf32, #tpu.memory_space<vmem>>, vector<8x1xf32>
    %50 = arith.mulf %48, %49 : vector<8x1xf32>
    %51 = vector.broadcast %46 : vector<8x1xf32> to vector<8x128xf32>
    %52 = arith.subf %42, %51 : vector<8x128xf32>
    %53 = math.exp %52 : vector<8x128xf32>
    %cst_23 = arith.constant dense<0.000000e+00> : vector<8xf32>
    %54 = vector.multi_reduction <add>, %53, %cst_23 [1] : vector<8x128xf32> to vector<8xf32>
    %55 = vector.shape_cast %54 : vector<8xf32> to vector<8x1xf32>
    %56 = arith.addf %50, %55 : vector<8x1xf32>
    %c0_24 = arith.constant 0 : index
    %c0_25 = arith.constant 0 : index
    %57 = vector.load %arg7[%c0_24, %c0_25] : memref<8x1xf32, #tpu.memory_space<vmem>>, vector<8x1xf32>
    tpu.vector_store %arg7[%c0_24, %c0_25], %56 {strides = array<i32>} : memref<8x1xf32, #tpu.memory_space<vmem>>, vector<8x1xf32>,
    %c0_26 = arith.constant 0 : index
    %c0_27 = arith.constant 0 : index
    %58 = vector.load %arg6[%c0_26, %c0_27] : memref<8x1xf32, #tpu.memory_space<vmem>>, vector<8x1xf32>
    tpu.vector_store %arg6[%c0_26, %c0_27], %46 {strides = array<i32>} : memref<8x1xf32, #tpu.memory_space<vmem>>, vector<8x1xf32>,
    %c0_i32_28 = arith.constant 0 : i32
    %59 = arith.cmpi eq, %arg1, %c0_i32_28 : i32
    %60 = arith.extui %59 : i1 to i32
    %c0_i32_29 = arith.constant 0 : i32
    %61 = arith.cmpi ne, %60, %c0_i32_29 : i32
    scf.if %61 {
      %c0_30 = arith.constant 0 : index
      %c0_31 = arith.constant 0 : index
      %62 = vector.load %arg8[%c0_30, %c0_31] : memref<8x1xf32, #tpu.memory_space<vmem>>, vector<8x1xf32>
      %cst_32 = arith.constant 1.350000e+00 : f32
      %63 = vector.broadcast %cst_32 : f32 to vector<8x1xf32>
      %64 = arith.subf %63, %62 : vector<8x1xf32>
      %cst_33 = arith.constant 0.000000e+00 : f32
      %65 = vector.broadcast %cst_33 : f32 to vector<8x1xf32>
      %66 = arith.maximumf %64, %65 : vector<8x1xf32>
      %cst_34 = arith.constant 6.500000e-01 : f32
      %67 = vector.broadcast %cst_34 : f32 to vector<8x1xf32>
      %68 = arith.subf %62, %67 : vector<8x1xf32>
      %69 = arith.mulf %66, %68 : vector<8x1xf32>
      %cst_35 = arith.constant 2.560000e+02 : f32
      %70 = vector.broadcast %cst_35 : f32 to vector<8x1xf32>
      %71 = arith.mulf %69, %70 : vector<8x1xf32>
      %c0_36 = arith.constant 0 : index
      %c0_37 = arith.constant 0 : index
      %72 = vector.load %arg6[%c0_36, %c0_37] : memref<8x1xf32, #tpu.memory_space<vmem>>, vector<8x1xf32>
      %c0_38 = arith.constant 0 : index
      %c0_39 = arith.constant 0 : index
      %73 = vector.load %arg7[%c0_38, %c0_39] : memref<8x1xf32, #tpu.memory_space<vmem>>, vector<8x1xf32>
      %74 = math.log %73 : vector<8x1xf32>
      %75 = arith.addf %72, %74 : vector<8x1xf32>
      %76 = arith.subf %75, %71 : vector<8x1xf32>
      %c0_40 = arith.constant 0 : index
      %c0_41 = arith.constant 0 : index
      %77 = vector.load %arg4[%c0_40, %c0_41] : memref<8x1xf32, #tpu.memory_space<vmem>>, vector<8x1xf32>
      tpu.vector_store %arg4[%c0_40, %c0_41], %76 {strides = array<i32>} : memref<8x1xf32, #tpu.memory_space<vmem>>, vector<8x1xf32>,
      %78 = arith.cmpf oge, %71, %72 : vector<8x1xf32>
      %79 = arith.extui %78 : vector<8x1xi1> to vector<8x1xi32>
      %80 = arith.sitofp %79 : vector<8x1xi32> to vector<8x1xf32>
      %c0_42 = arith.constant 0 : index
      %c0_43 = arith.constant 0 : index
      %81 = vector.load %arg5[%c0_42, %c0_43] : memref<8x1xf32, #tpu.memory_space<vmem>>, vector<8x1xf32>
      tpu.vector_store %arg5[%c0_42, %c0_43], %80 {strides = array<i32>} : memref<8x1xf32, #tpu.memory_space<vmem>>, vector<8x1xf32>,
    } else {
    }
    return
  }
  func.func @transform_0(%arg0: i32, %arg1: i32) -> (i32, i32) {
    %c0_i32 = arith.constant 0 : i32
    return %arg0, %arg1 : i32, i32
  }
  func.func @transform_1(%arg0: i32, %arg1: i32) -> (i32, i32) {
    %c0_i32 = arith.constant 0 : i32
    %c0_i32_0 = arith.constant 0 : i32
    return %arg0, %c0_i32 : i32, i32
  }
  func.func @transform_2(%arg0: i32, %arg1: i32) -> (i32, i32) {
    %c0_i32 = arith.constant 0 : i32
    %c0_i32_0 = arith.constant 0 : i32
    return %arg0, %c0_i32 : i32, i32
  }
  func.func @transform_3(%arg0: i32, %arg1: i32) -> (i32, i32) {
    %c0_i32 = arith.constant 0 : i32
    %c0_i32_0 = arith.constant 0 : i32
    return %arg0, %c0_i32 : i32, i32
  }
}

</mosaic_0001>

<llo_original>
// kernel: tpu_custom_call.1
$region0: #{tpu_custom_call.1}
  #allocation0 [shape = 'u32[]', space=smem, size = 0x4, offset = 0x4, fixed_abs, tag = 'smem constant byte address 0x4 - core index']
  #allocation1 [shape = 'u32[144,128]{1,0:T(1,128)}', space=vmem, size = 0x12000, scoped, tag = 'internal scratch']
  #allocation2 [shape = 'f32[8,1]{1,0:T(8,128)}', space=vmem, size = 0x1000, scoped, tag = 'scratch operand']
  #allocation3 [shape = 'f32[8,1]{1,0:T(8,128)}', space=vmem, size = 0x1000, scoped, tag = 'scratch operand']
  #allocation4 [shape = 'f32[8,1]{1,0:T(8,128)}', space=vmem, size = 0x1000, scoped, tag = 'scratch operand']
  %s0 = inlined_call_operand.vmem [shape: f32[8,128], index: 0, kind: input, shape index: {}]
  %s1 = inlined_call_operand.vmem [shape: s32[8,1], index: 1, kind: input, shape index: {}]
  %s2 = inlined_call_operand.vmem [shape: f32[8,1], index: 2, kind: output, shape index: {0}]
  %s3 = inlined_call_operand.vmem [shape: f32[8,1], index: 3, kind: output, shape index: {1}]
  %4 = xla_tuple %s2, %s3
  %s5 = sld [smem:[#allocation0]]
  $region34: #{tpu_custom_call.1} parent=0
    _
  %s7 = ssub.s32 1, %s5
  %s8 = scalar_select 0, %s7, %s5
  // Predicated region
  $region2: #{tpu_custom_call.1} parent=0 // pred_check
    _
  $region3: #{tpu_custom_call.1} parent=0 // pred_check_branch
    %10 = sbr.rel (0) target = $region5
  $region4: #{tpu_custom_call.1} parent=0 // pred_region
    _
  $region5: #{tpu_custom_call.1} parent=0 // pred_fallthru
    _
  // Predicated region
  $region6: #{tpu_custom_call.1} parent=0 // pred_check
    _
  $region7: #{tpu_custom_call.1} parent=0 // pred_check_branch
    %12 = sbr.rel (0) target = $region9
  $region8: #{tpu_custom_call.1} parent=0 // pred_region
    _
  $region9: #{tpu_custom_call.1} parent=0 // pred_fallthru
    _
  %p13 = scmp.eq.s32.totalorder 0, 0
  // Predicated region
  $region10: #{tpu_custom_call.1} parent=0 // pred_check
    %p14 = pneg %p13
  $region11: #{tpu_custom_call.1} parent=0 // pred_check_branch
    %16 = sbr.rel (%p14) target = $region13
  $region12: #{tpu_custom_call.1} parent=0 // pred_region
    %vm17 = vcmask 7168
    %18 = vst.msk [vmem:[#allocation2] sm:$0xff] %vm17, -inf
    %19 = vst.msk [vmem:[#allocation3] sm:$0xff] %vm17, 0.0
    %20 = vst.msk [vmem:[#allocation4] sm:$0xff] %vm17, 0.0
  $region13: #{tpu_custom_call.1} parent=0 // pred_fallthru
    _
  %v21 = vld [vmem:[%s0] sm:$0xff]
  %v22 = vld [vmem:[%s1] sm:$0xff]
  %s23 = smul.u32 0, 128
  %v24 = vlaneseq
  %v25 = vand.u32 %v24, 127
  %v26 = vstv %s23
  %v27 = vadd.s32 %v26, %v25
  %28 = vset.pattern.permute.xlu0 0
  %29 = vperm.xlu0 %28, %v22
  %v30 = vpop.permute.xlu0 %29
  %vm31 = vcmp.eq.s32.totalorder %v27, %v30
  %v32 = vadd.f32 %v21, 0.35
  %v33 = vmax.f32 %v32, 0.0
  %v34 = vsub.f32 %v21, 0.35
  %v35 = vmul.f32 %v33, %v34
  %v36 = vmul.f32 %v35, 256.0
  %v37 = vsel %vm31, %v21, 0.0
  %38 = vadd.xlane.f32.xlu0 %v37
  %v39 = vpop.xlane.xlu0 %38
  %v40 = vld [vmem:[#allocation4] sm:$0xff]
  %v41 = vadd.f32 %v40, %v39
  %vm42 = vcmask 7168
  %43 = vst.msk [vmem:[#allocation4] sm:$0xff] %vm42, %v41
  %v44 = vsub.f32 1.35, %v39
  %v45 = vmax.f32 %v44, 0.0
  %v46 = vsub.f32 %v39, 0.65
  %v47 = vmul.f32 %v45, %v46
  %v48 = vmul.f32 %v47, 256.0
  %v49 = vsel %vm31, %v48, %v36
  %vm50 = vcmp.lt.s32.totalorder %v27, 16
  %v51 = vsel %vm50, %v49, -inf
  %v52 = vld [vmem:[#allocation2] sm:$0xff]
  %53 = vmax.xlane.f32.xlu0 %v51
  %v54 = vpop.xlane.xlu0 %53
  %v55 = vmax.f32 %v52, %v54
  %v56 = vsub.f32 %v52, %v55
  %v57 = vmul.f32 %v56, 1.442695
  %v58 = vpow.pop %v57
  %v59 = vld [vmem:[#allocation3] sm:$0xff]
  %v60 = vmul.f32 %v58, %v59
  %62 = vset.pattern.permute.xlu0 0
  %63 = vperm.xlu0 %62, %v55
  %v64 = vpop.permute.xlu0 %63
  %v66 = vsub.f32 %v51, %v64
  %v67 = vmul.f32 %v66, 1.442695
  %v68 = vpow.pop %v67
  %69 = vadd.xlane.f32.xlu0 %v68
  %v70 = vpop.xlane.xlu0 %69
  %v71 = vadd.f32 %v60, %v70
  %72 = vst.msk [vmem:[#allocation3] sm:$0xff] %vm42, %v71
  %73 = vst.msk [vmem:[#allocation2] sm:$0xff] %vm42, %v55
  // Predicated region
  $region14: #{tpu_custom_call.1} parent=0 // pred_check
    %p74 = pneg %p13
  $region15: #{tpu_custom_call.1} parent=0 // pred_check_branch
    %76 = sbr.rel (%p74) target = $region17
  $region16: #{tpu_custom_call.1} parent=0 // pred_region
    %v77 = vld [vmem:[#allocation4] sm:$0xff]
    %v78 = vsub.f32 1.35, %v77
    %v79 = vmax.f32 %v78, 0.0
    %v80 = vsub.f32 %v77, 0.65
    %v81 = vmul.f32 %v79, %v80
    %v82 = vmul.f32 %v81, 256.0
    %v83 = vld [vmem:[#allocation2] sm:$0xff]
    %v84 = vld [vmem:[#allocation3] sm:$0xff]
    %v85 = vlog2.pop %v84
    %v86 = vmul.f32 %v85, 0.6931472
    %v87 = vadd.f32 %v83, %v86
    %v88 = vsub.f32 %v87, %v82
    %89 = vst.msk [vmem:[%s2] sm:$0xff] %vm42, %v88
    %vm90 = vcmp.ge.f32.partialorder %v82, %v83
    %v91 = vsel %vm90, 1, 0
    %v92 = vcvt.s32.f32 %v91
    %93 = vst.msk [vmem:[%s3] sm:$0xff] %vm42, %v92
  $region17: #{tpu_custom_call.1} parent=0 // pred_fallthru
    _
  // Predicated region
  $region18: #{tpu_custom_call.1} parent=0 // pred_check
    _
  $region19: #{tpu_custom_call.1} parent=0 // pred_check_branch
    %95 = sbr.rel (0) target = $region21
  $region20: #{tpu_custom_call.1} parent=0 // pred_region
    _
  $region21: #{tpu_custom_call.1} parent=0 // pred_fallthru
    _
  // Predicated region
  $region22: #{tpu_custom_call.1} parent=0 // pred_check
    _
  $region23: #{tpu_custom_call.1} parent=0 // pred_check_branch
    %97 = sbr.rel (0) target = $region25
  $region24: #{tpu_custom_call.1} parent=0 // pred_region
    _
  $region25: #{tpu_custom_call.1} parent=0 // pred_fallthru
    _
  // Predicated region
  $region26: #{tpu_custom_call.1} parent=0 // pred_check
    _
  $region27: #{tpu_custom_call.1} parent=0 // pred_check_branch
    %99 = sbr.rel (0) target = $region29
  $region28: #{tpu_custom_call.1} parent=0 // pred_region
    _
  $region29: #{tpu_custom_call.1} parent=0 // pred_fallthru
    _
  // Predicated region
  $region30: #{tpu_custom_call.1} parent=0 // pred_check
    _
  $region31: #{tpu_custom_call.1} parent=0 // pred_check_branch
    %101 = sbr.rel (0) target = $region33
  $region32: #{tpu_custom_call.1} parent=0 // pred_region
    _
  $region33: #{tpu_custom_call.1} parent=0 // pred_fallthru
    _

</llo_original>
